<compile_context>
chip_gen: v6e
topology: v6e:2x2x1
jax: 0.10.0
libtpu: 0.0.40
codegen_flags: <defaults>
</compile_context>

<pallas_src>
import functools

import jax
import jax.numpy as jnp
from jax import lax
from jax.experimental import pallas as pl
from jax.experimental.pallas import tpu as pltpu


def _qkv_proj_kernel(x_ref, w_ref, o_ref):
    """Fused projection: (1, tp, C) @ (C, 4D) -> (1, tp, 4D).

    Output columns: [q * scale | v (residual) | k | v @ Wp^T].
    """
    o_ref[0] = jnp.dot(x_ref[0], w_ref[...],
                       preferred_element_type=jnp.float32).astype(o_ref.dtype)


def _flash_attn_kernel(qr_ref, kv_ref, bp_ref, o_ref, m_sc, l_sc, acc_sc, *, d):
    """One (batch, q-tile, kv-tile) step of online-softmax attention.

    qr_ref : (1, tq, 2D)  [q*scale | v_res] — block index depends only on (b, qi),
                          so Pallas DMAs it once per q-tile.
    kv_ref : (1, tk, 2D)  [k | v@Wp^T]      — streamed per kv step (bf16).
    bp_ref : (1, D)       output-projection bias (f32).
    """
    ki = pl.program_id(2)
    nk = pl.num_programs(2)

    @pl.when(ki == 0)
    def _init():
        m_sc[...] = jnp.full_like(m_sc, -jnp.inf)
        l_sc[...] = jnp.zeros_like(l_sc)
        acc_sc[...] = jnp.zeros_like(acc_sc)

    q = qr_ref[0, :, :d]      # (tq, D) bf16, scale pre-folded
    k = kv_ref[0, :, :d]      # (tk, D) bf16
    v = kv_ref[0, :, d:]      # (tk, D) bf16, Wp pre-folded

    # s = q @ k^T: contract the D axes directly (no materialized transpose),
    # bf16 inputs on the MXU with f32 accumulation.
    s = lax.dot_general(q, k, (((1,), (1,)), ((), ())),
                        preferred_element_type=jnp.float32)             # (tq, tk)

    # Online softmax update — f32 VPU math (v5e has no bf16 VPU path).
    m_new = jnp.maximum(m_sc[...], jnp.max(s, axis=-1, keepdims=True))
    alpha = jnp.exp(m_sc[...] - m_new)
    p = jnp.exp(s - m_new)
    l_sc[...] = alpha * l_sc[...] + jnp.sum(p, axis=-1, keepdims=True)
    acc_sc[...] = alpha * acc_sc[...] + jnp.dot(
        p.astype(v.dtype), v, preferred_element_type=jnp.float32)
    m_sc[...] = m_new

    @pl.when(ki == nk - 1)
    def _finalize():
        vres = qr_ref[0, :, d:].astype(jnp.float32)
        out = acc_sc[...] / l_sc[...]        # exact; runs once per (b, q-tile)
        o_ref[0] = (vres + out + bp_ref[...]).astype(o_ref.dtype)


def _pick_tile(n, target):
    """Largest tile <= target that divides n and is a multiple of 8 (or n itself)."""
    if n <= target:
        return n
    t = (target // 8) * 8
    while t >= 8:
        if n % t == 0:
            return t
        t -= 8
    return n


def prepare_attention_params(w_qkv, w_proj, b_proj, *, dim, num_heads=1,
                             qk_scale=None):
    """One-time weight preparation (at parameter-init time, not per forward).

    w_qkv : (3D, C) torch Linear layout; w_proj : (D, D) torch layout; b_proj : (D,).
    Returns:
      w_fused : (C, 4D)  columns [q*scale | v_res | k | v @ Wp^T]
                 (cols [0:2D] feed the q-tile stream, cols [2D:4D] the kv stream)
      bp      : (1, D)   projection bias.
    """
    D = w_qkv.shape[0] // 3
    head_dim = dim // num_heads
    scale = qk_scale if qk_scale is not None else head_dim ** (-0.5)

    w = w_qkv.T                                # single transpose -> (C, 3D)
    wq = w[:, 0 * D:1 * D] * scale             # scale folded into q projection
    wk = w[:, 1 * D:2 * D]
    wv = w[:, 2 * D:3 * D]
    wv_proj = wv @ w_proj.T                    # output projection folded into v
    w_fused = jnp.concatenate([wq, wv, wk, wv_proj], axis=1)   # (C, 4D)
    bp = b_proj.reshape(1, D)
    return w_fused, bp


def attention_pallas(x, w_fused, bp, *, tq=256, tk=512, tp=256,
                     attn_dtype=jnp.bfloat16, vmem_limit_bytes=None):
    """x: (B, N, C); (w_fused, bp) from prepare_attention_params. Returns (B, N, D).

    Defaults (tq=256, tk=512) suit v6e/v7x with the bf16 (tk, 2D) kv stream;
    on v5e pass tq=tk=128..256 or set vmem_limit_bytes against its 16 MiB
    scoped default.  Tiles are shrunk automatically to divide N.
    """
    B, N, C = x.shape
    D = w_fused.shape[1] // 4
    tq = _pick_tile(N, tq)
    tk = _pick_tile(N, tk)
    tp = _pick_tile(N, tp)
    assert N % tq == 0 and N % tk == 0 and N % tp == 0

    extra_cp = {"vmem_limit_bytes": vmem_limit_bytes} if vmem_limit_bytes else {}

    # ---- Stage 1: fused QKV (+residual-v, +folded Wp) projection, once per token.
    qkvr = pl.pallas_call(
        _qkv_proj_kernel,
        out_shape=jax.ShapeDtypeStruct((B, N, 4 * D), attn_dtype),
        grid_spec=pltpu.PrefetchScalarGridSpec(
            num_scalar_prefetch=0,
            grid=(B, N // tp),
            in_specs=[
                pl.BlockSpec((1, tp, C), lambda b, i: (b, i, 0)),
                pl.BlockSpec((C, 4 * D), lambda b, i: (0, 0)),
            ],
            out_specs=pl.BlockSpec((1, tp, 4 * D), lambda b, i: (b, i, 0)),
        ),
        compiler_params=pltpu.CompilerParams(
            dimension_semantics=("parallel", "parallel"), **extra_cp),
    )(x, w_fused)

    # ---- Stage 2: flash (online-softmax) attention over the precomputed tiles.
    kernel = functools.partial(_flash_attn_kernel, d=D)
    out = pl.pallas_call(
        kernel,
        out_shape=jax.ShapeDtypeStruct((B, N, D), x.dtype),
        grid_spec=pltpu.PrefetchScalarGridSpec(
            num_scalar_prefetch=0,
            grid=(B, N // tq, N // tk),
            in_specs=[
                # [q*scale | v_res] for this q-tile (cols [0:2D]); DMA'd once per q-tile.
                pl.BlockSpec((1, tq, 2 * D), lambda b, qi, ki: (b, qi, 0)),
                # [k | v@Wp^T] for this kv-tile (cols [2D:4D]); streamed per kv step.
                pl.BlockSpec((1, tk, 2 * D), lambda b, qi, ki: (b, ki, 1)),
                pl.BlockSpec((1, D), lambda b, qi, ki: (0, 0)),
            ],
            out_specs=pl.BlockSpec((1, tq, D), lambda b, qi, ki: (b, qi, 0)),
            scratch_shapes=[
                pltpu.VMEM((tq, 1), jnp.float32),   # running max m
                pltpu.VMEM((tq, 1), jnp.float32),   # running denom l
                pltpu.VMEM((tq, D), jnp.float32),   # running output accumulator
            ],
        ),
        compiler_params=pltpu.CompilerParams(
            dimension_semantics=("parallel", "parallel", "arbitrary"), **extra_cp),
    )(qkvr, qkvr, bp)
    return out


def attention_ref(x, w_qkv, w_proj, b_proj, *, num_heads=1, dim=None):
    """Plain-JAX f32 reference mirroring the PyTorch forward (num_heads=1)."""
    B, N, C = x.shape
    D = w_qkv.shape[0] // 3
    head_dim = (dim if dim is not None else C) // num_heads
    scale = head_dim ** (-0.5)
    qkv = x @ w_qkv.T                                    # (B, N, 3D)
    qkv = qkv.reshape(B, N, 3, num_heads, D).transpose(2, 0, 3, 1, 4)
    q, k, v = qkv[0], qkv[1], qkv[2]                     # (B, 1, N, D)
    attn = (q * scale) @ jnp.swapaxes(k, -2, -1)         # (B, 1, N, N)
    attn = jax.nn.softmax(attn, axis=-1)
    out = (attn @ v).transpose(0, 2, 1, 3).reshape(B, N, D)
    out = out @ w_proj.T + b_proj
    return jnp.squeeze(v, axis=1) + out


if __name__ == "__main__":
    B, N, dim, in_dim, num_heads = 2, 16, 32, 64, 1

    key = jax.random.PRNGKey(0)
    k_x, k_qkv, k_p, k_b = jax.random.split(key, 4)

    x = jax.random.normal(k_x, (B, N, dim), dtype=jnp.float32)
    # Deterministic synthetic parameters (torch Linear weight layout: (out, in)).
    w_qkv = 0.05 * jax.random.normal(k_qkv, (3 * in_dim, dim), dtype=jnp.float32)
    w_proj = 0.05 * jax.random.normal(k_p, (in_dim, in_dim), dtype=jnp.float32)
    b_proj = 0.01 * jax.random.normal(k_b, (in_dim,), dtype=jnp.float32)

    # One-time parameter prep (hoisted out of the per-call path).
    w_fused, bp = prepare_attention_params(
        w_qkv, w_proj, b_proj, dim=dim, num_heads=num_heads)

    out = attention_pallas(x, w_fused, bp)
    out = jax.block_until_ready(out)

    ref = attention_ref(x, w_qkv, w_proj, b_proj, num_heads=num_heads, dim=dim)
    assert out.shape == (B, N, in_dim)
    # bf16 MXU matmuls + bf16 qkvr intermediate (per perf review) -> bf16-level
    # tolerance vs. the all-f32 reference.
    assert jnp.allclose(out, ref, atol=2e-2, rtol=2e-2), "mismatch vs reference"

    print("KERNEL_OK")
</pallas_src>

<mosaic_0001>
module attributes {stable_mosaic.version = 11 : i64} {
  func.func @_qkv_proj_kernel(%arg0: i32, %arg1: i32, %arg2: memref<1x16x32xf32, #tpu.memory_space<vmem>>, %arg3: memref<32x256xf32, #tpu.memory_space<vmem>>, %arg4: memref<1x16x256xbf16, #tpu.memory_space<vmem>>) attributes {dimension_semantics = [#tpu.dimension_semantics<parallel>, #tpu.dimension_semantics<parallel>], iteration_bounds = array<i64: 2, 1>, scalar_prefetch = 0 : i64, scratch_operands = 0 : i64, tpu.core_type = #tpu.core_type<tc>, window_params = [{transform_indices = @transform_0, window_bounds = array<i64: 1, 16, 32>}, {pipeline_mode = #tpu.pipeline_mode<synchronous>, transform_indices = @transform_1, window_bounds = array<i64: 32, 256>}, {transform_indices = @transform_2, window_bounds = array<i64: 1, 16, 256>}]} {
    %c0 = arith.constant 0 : index
    %c0_0 = arith.constant 0 : index
    %c0_1 = arith.constant 0 : index
    %0 = vector.load %arg2[%c0, %c0_0, %c0_1] : memref<1x16x32xf32, #tpu.memory_space<vmem>>, vector<1x16x32xf32>
    %1 = vector.shape_cast %0 : vector<1x16x32xf32> to vector<16x32xf32>
    %c0_2 = arith.constant 0 : index
    %c0_3 = arith.constant 0 : index
    %2 = vector.load %arg3[%c0_2, %c0_3] : memref<32x256xf32, #tpu.memory_space<vmem>>, vector<32x256xf32>
    %cst = arith.constant dense<0.000000e+00> : vector<16x256xf32>
    %3 = tpu.matmul %1, %2, %cst {dimension_numbers = #tpu.dot_dimension_numbers<[1], [0], [0], [1], [0, 0, 1, 1], [], []>} : vector<16x32xf32>, vector<32x256xf32>, vector<16x256xf32> -> vector<16x256xf32>
    %4 = arith.truncf %3 : vector<16x256xf32> to vector<16x256xbf16>
    %c0_4 = arith.constant 0 : index
    %c0_5 = arith.constant 0 : index
    %c0_6 = arith.constant 0 : index
    %5 = vector.load %arg4[%c0_4, %c0_5, %c0_6] : memref<1x16x256xbf16, #tpu.memory_space<vmem>>, vector<1x16x256xbf16>
    %6 = vector.shape_cast %5 : vector<1x16x256xbf16> to vector<16x256xbf16>
    %7 = vector.shape_cast %4 : vector<16x256xbf16> to vector<1x16x256xbf16>
    tpu.vector_store %arg4[%c0_4, %c0_5, %c0_6], %7 {strides = array<i32>} : memref<1x16x256xbf16, #tpu.memory_space<vmem>>, vector<1x16x256xbf16>,
    return
  }
  func.func @transform_0(%arg0: i32, %arg1: i32) -> (i32, i32, i32) {
    %c0_i32 = arith.constant 0 : i32
    %c0_i32_0 = arith.constant 0 : i32
    return %arg0, %arg1, %c0_i32 : i32, i32, i32
  }
  func.func @transform_1(%arg0: i32, %arg1: i32) -> (i32, i32) {
    %c0_i32 = arith.constant 0 : i32
    %c0_i32_0 = arith.constant 0 : i32
    %c0_i32_1 = arith.constant 0 : i32
    return %c0_i32, %c0_i32_0 : i32, i32
  }
  func.func @transform_2(%arg0: i32, %arg1: i32) -> (i32, i32, i32) {
    %c0_i32 = arith.constant 0 : i32
    %c0_i32_0 = arith.constant 0 : i32
    return %arg0, %arg1, %c0_i32 : i32, i32, i32
  }
}

</mosaic_0001>

<llo_original>
// kernel: tpu_custom_call.1
$region0: #{tpu_custom_call.1}
  #allocation0 [shape = 'u32[]', space=smem, size = 0x4, offset = 0x4, fixed_abs, tag = 'smem constant byte address 0x4 - core index']
  #allocation1 [shape = 'u32[144,128]{1,0:T(1,128)}', space=vmem, size = 0x12000, scoped, tag = 'internal scratch']
  %s0 = inlined_call_operand.hbm [shape: f32[2,16,32], index: 0, kind: input, shape index: {}]
  %s1 = inlined_call_operand.hbm [shape: f32[32,256], index: 1, kind: input, shape index: {}]
  %s2 = inlined_call_operand.hbm [shape: bf16[2,16,256], index: 2, kind: output, shape index: {}]
  %s3 = sld [smem:[#allocation0]]
  $region49: #{tpu_custom_call.1} parent=0
    _
  %s5 = ssub.s32 1, %s3
  %s6 = scalar_select 0, %s5, %s3
  $region1: #{tpu_custom_call.1} parent=0
    #allocation2 [shape = 'u8[16384]{0}', space=vmem, size = 0x4000, scoped, tag = 'input window, operand 0']
    #allocation3 [shape = 's32[2]{0}', space=sflag, size = 0x8, scoped, tag = 'scoped memory for tpu_custom_call.1']
    #allocation4 [shape = 's32[2]{0}', space=sflag, size = 0x8, scoped, tag = 'scoped memory for tpu_custom_call.1']
    #allocation5 [shape = 'u8[32768]{0}', space=vmem, size = 0x8000, scoped, tag = 'input window, operand 1, single buffered']
    #allocation6 [shape = 's32[1]{0}', space=sflag, size = 0x4, scoped, tag = 'scoped memory for tpu_custom_call.1']
    #allocation7 [shape = 'u8[16384]{0}', space=vmem, size = 0x4000, scoped, tag = 'output window, operand 0']
    %7 = vsyncpa [#allocation3], 0
    %s8 = scalar_lea.sflag [#allocation3], 1
    %9 = vsyncpa %s8, 0
    %10 = vsyncpa [#allocation6], 0
    %11 = vsyncpa [#allocation4], 0
    %s12 = scalar_lea.sflag [#allocation4], 1
    %13 = vsyncpa %s12, 0
    loop: start=0, step=1, limit=4
    $region2: #{tpu_custom_call.1} parent=1 // loop_pre_header
      _
    $region3: #{tpu_custom_call.1} parent=1 // loop_header
      %s15 = sphi 0, %s19
      %p16 = scmp.ge.s32.totalorder %s15, 4
      %s22 = sphi 0, %s34
      %s23 = sphi 0, %s30
      %s24 = sphi 0, %s22
      %s25 = sphi 0, %s23
      %s26 = sphi 0, %s24
      %s27 = sphi 0, %s25
      %s39 = sphi 0, %s41
      %s42 = sphi 0, %s39
      %s43 = sphi 0, %s42
      %s59 = sphi 0, %s43
      %s63 = sphi 0, %s63
      %s65 = sphi 0, %s63
      %s66 = sphi 0, %s65
      %s80 = sphi 0, %s66
      %s88 = sphi 0, %s90
      %s91 = sphi 0, %s88
      %s92 = sphi 0, %s91
      %s108 = sphi 0, %s92
    $region4: #{tpu_custom_call.1} parent=1 // loop_header_branch
      %18 = sbr.rel (%p16) target = $region8
    $region5: #{tpu_custom_call.1} parent=1 // loop_body
      %s20 = ssub.s32 %s15, 1
      %s21 = ssub.s32 %s15, 2
      %s28 = sadd.s32 1, %s23
      %p29 = scmp.ge.s32.totalorder %s28, 1
      %s30 = scalar_select %p29, 0, %s28
      %s31 = sadd.s32 1, %s22
      %s32 = scalar_select %p29, %s31, %s22
      %p33 = scmp.ge.s32.totalorder %s32, 2
      %s34 = scalar_select %p33, 0, %s32
      %s35 = ssub.s32 %s22, %s34
      %s36 = ssub.s32 %s23, %s30
      %s37 = sor.u32 %s35, %s36
      %p38 = scmp.eq.s32.totalorder %s37, 0
      %s40 = sadd.s32 %s39, 1
      %s41 = scalar_select %p38, %s39, %s40
      %p44 = pneg %p38
      %p45 = scmp.eq.s32.totalorder %s15, 1
      %p46 = por %p44, %p45
      %p47 = scmp.ne.s32.totalorder %s39, %s42
      %p48 = scmp.eq.s32.totalorder %s15, 0
      %p49 = por %p47, %p48
      %p50 = scmp.ne.s32.totalorder %s39, %s42
      %p51 = scmp.eq.s32.totalorder %s20, 1
      %p52 = por %p50, %p51
      %p53 = scmp.ne.s32.totalorder %s42, %s43
      %p54 = scmp.eq.s32.totalorder %s20, 0
      %p55 = por %p53, %p54
      %p56 = scmp.ne.s32.totalorder %s42, %s43
      %p57 = scmp.eq.s32.totalorder %s21, 1
      %p58 = por %p56, %p57
      %p60 = scmp.ne.s32.totalorder %s43, %s59
      %p61 = scmp.eq.s32.totalorder %s21, 0
      %p62 = por %p60, %p61
      %s64 = sadd.s32 %s63, 1
      %p67 = scmp.eq.s32.totalorder %s15, 1
      %p68 = scmp.ne.s32.totalorder %s63, %s65
      %p69 = scmp.eq.s32.totalorder %s15, 0
      %p70 = por %p68, %p69
      %p71 = scmp.ne.s32.totalorder %s63, %s65
      %p72 = scmp.eq.s32.totalorder %s20, 1
      %p73 = por %p71, %p72
      %p74 = scmp.ne.s32.totalorder %s65, %s66
      %p75 = scmp.eq.s32.totalorder %s20, 0
      %p76 = por %p74, %p75
      %p77 = scmp.ne.s32.totalorder %s65, %s66
      %p78 = scmp.eq.s32.totalorder %s21, 1
      %p79 = por %p77, %p78
      %p81 = scmp.ne.s32.totalorder %s66, %s80
      %p82 = scmp.eq.s32.totalorder %s21, 0
      %p83 = por %p81, %p82
      %s84 = ssub.s32 %s22, %s34
      %s85 = ssub.s32 %s23, %s30
      %s86 = sor.u32 %s84, %s85
      %p87 = scmp.eq.s32.totalorder %s86, 0
      %s89 = sadd.s32 %s88, 1
      %s90 = scalar_select %p87, %s88, %s89
      %p93 = pneg %p87
      %p94 = scmp.eq.s32.totalorder %s15, 1
      %p95 = por %p93, %p94
      %p96 = scmp.ne.s32.totalorder %s88, %s91
      %p97 = scmp.eq.s32.totalorder %s15, 0
      %p98 = por %p96, %p97
      %p99 = scmp.ne.s32.totalorder %s88, %s91
      %p100 = scmp.eq.s32.totalorder %s20, 1
      %p101 = por %p99, %p100
      %p102 = scmp.ne.s32.totalorder %s91, %s92
      %p103 = scmp.eq.s32.totalorder %s20, 0
      %p104 = por %p102, %p103
      %p105 = scmp.ne.s32.totalorder %s91, %s92
      %p106 = scmp.eq.s32.totalorder %s21, 1
      %p107 = por %p105, %p106
      %p109 = scmp.ne.s32.totalorder %s92, %s108
      %p110 = scmp.eq.s32.totalorder %s21, 0
      %p111 = por %p109, %p110
      %p112 = scmp.le.s32.totalorder 1, %s15
      %p113 = scmp.lt.s32.totalorder %s15, 3
      %p114 = pnand %p112, %p113
      %p115 = pneg %p114
      // Predicated region
      $region9: #{tpu_custom_call.1} parent=5 // pred_check
        _
      $region10: #{tpu_custom_call.1} parent=5 // pred_check_branch
        %117 = sbr.rel (%p114) target = $region12
      $region11: #{tpu_custom_call.1} parent=5 // pred_region
        %s118 = ssub.s32 %s15, 1
        // Predicated region
        $region13: #{tpu_custom_call.1} parent=11 // pred_check
          %p119 = pneg %p76
        $region14: #{tpu_custom_call.1} parent=11 // pred_check_branch
          %121 = sbr.rel (%p119) target = $region16
        $region15: #{tpu_custom_call.1} parent=11 // pred_region
          %s123 = ssub.s32 1024, 1024
          %124 = vsyncadd [#allocation6], %s123
          %s125 = sshll.u32 [#allocation5], 4
          %s126 = int_to_ptr.vmem [resolvable:$true] %s125
          %131 = dma.hbm_to_vmem [thread:$0]  %s1, 1024, %s126, [#allocation6], 256, 256, 16
        $region16: #{tpu_custom_call.1} parent=11 // pred_fallthru
          _
      $region12: #{tpu_custom_call.1} parent=5 // pred_fallthru
        _
      %p132 = scmp.lt.s32.totalorder %s15, 2
      // Predicated region
      $region17: #{tpu_custom_call.1} parent=5 // pred_check
        %p133 = pneg %p132
      $region18: #{tpu_custom_call.1} parent=5 // pred_check_branch
        %135 = sbr.rel (%p133) target = $region20
      $region19: #{tpu_custom_call.1} parent=5 // pred_region
        // Predicated region
        $region21: #{tpu_custom_call.1} parent=19 // pred_check
          %p136 = pneg %p49
        $region22: #{tpu_custom_call.1} parent=19 // pred_check_branch
          %138 = sbr.rel (%p136) target = $region24
        $region23: #{tpu_custom_call.1} parent=19 // pred_region
          %s139 = sand.u32 %s39, 1
          %s140 = scalar_lea.sflag [#allocation3], %s139
          %s141 = sand.u32 %s39, 1
          %s142 = smul.addr %s141, 16
          %s143 = scalar_lea.vmem [#allocation2], %s142
          %s144 = smul.u32 2, %s23
          %s146 = ssub.s32 256, 256
          %147 = vsyncadd %s140, %s146
          %s148 = smul.addr %s22, 2
          %s149 = sadd.s32 %s144, %s148
          %s150 = smul.addr %s149, 128
          %s151 = scalar_lea.hbm %s0, %s150
          %s152 = sshll.u32 %s143, 4
          %s153 = int_to_ptr.vmem [resolvable:$true] %s152
          %158 = dma.hbm_to_vmem [thread:$0]  %s151, 256, %s153, %s140, 128, 128, 8
        $region24: #{tpu_custom_call.1} parent=19 // pred_fallthru
          _
      $region20: #{tpu_custom_call.1} parent=5 // pred_fallthru
        _
      %p159 = scmp.le.s32.totalorder 1, %s15
      %p160 = scmp.lt.s32.totalorder %s15, 3
      %p161 = pnand %p159, %p160
      %p162 = pneg %p161
      // Predicated region
      $region25: #{tpu_custom_call.1} parent=5 // pred_check
        _
      $region26: #{tpu_custom_call.1} parent=5 // pred_check_branch
        %164 = sbr.rel (%p161) target = $region28
      $region27: #{tpu_custom_call.1} parent=5 // pred_region
        %s165 = ssub.s32 %s15, 1
        %s166 = sand.u32 %s42, 1
        %s167 = scalar_lea.sflag [#allocation3], %s166
        %s168 = sand.u32 %s42, 1
        %s169 = smul.addr %s168, 16
        %s170 = scalar_lea.vmem [#allocation2], %s169
        // Predicated region
        $region29: #{tpu_custom_call.1} parent=27 // pred_check
          %p171 = pneg %p55
        $region30: #{tpu_custom_call.1} parent=27 // pred_check_branch
          %173 = sbr.rel (%p171) target = $region32
        $region31: #{tpu_custom_call.1} parent=27 // pred_region
          %174 = dma.done %s167, 256
        $region32: #{tpu_custom_call.1} parent=27 // pred_fallthru
          _
        // Predicated region
        $region33: #{tpu_custom_call.1} parent=27 // pred_check
          %p175 = pneg %p76
        $region34: #{tpu_custom_call.1} parent=27 // pred_check_branch
          %177 = sbr.rel (%p175) target = $region36
        $region35: #{tpu_custom_call.1} parent=27 // pred_region
          %178 = dma.done [#allocation6], 1024
        $region36: #{tpu_custom_call.1} parent=27 // pred_fallthru
          _
        %s179 = sand.u32 %s42, 1
        %s180 = scalar_lea.sflag [#allocation3], %s179
        %s181 = sand.u32 %s42, 1
        %s182 = smul.addr %s181, 16
        %s183 = scalar_lea.vmem [#allocation2], %s182
        %p184 = pneg %p55
        %p185 = pneg %p52
        %p186 = pneg %p76
        %p187 = pneg %p73
        %p188 = pneg %p104
        %p189 = pneg %p101
        %s190 = sand.u32 %s91, 1
        %s191 = scalar_lea.sflag [#allocation4], %s190
        %s192 = sand.u32 %s91, 1
        %s193 = smul.addr %s192, 16
        %s194 = scalar_lea.vmem [#allocation7], %s193
        %s195 = smul.u32 2, %s25
        %s196 = smul.u32 2, %s25
        %v197 = vld [vmem:[%s170] sm:$0xff]
        %v198 = vld [vmem:[%s170 + $0x8] sm:$0xff]
        %v199 = vld [vmem:[#allocation5] sm:$0xff]
        %v200 = vld [vmem:[#allocation5 + $0x8] sm:$0xff]
        %v201 = vld [vmem:[#allocation5 + $0x10] sm:$0xff]
        %v202 = vld [vmem:[#allocation5 + $0x18] sm:$0xff]
        %v203 = vld [vmem:[#allocation5 + $0x20] sm:$0xff]
        %v204 = vld [vmem:[#allocation5 + $0x28] sm:$0xff]
        %v205 = vld [vmem:[#allocation5 + $0x30] sm:$0xff]
        %v206 = vld [vmem:[#allocation5 + $0x38] sm:$0xff]
        %vm207 = vcmask 261120
        %v209 = vsel %vm207, %v197, 0
        %v212 = vsel %vm207, %v198, 0
        %214 = vmatprep.subr.mxu0 0.0
        %215 = vmatpush1.msra.mxu0 0.0
        %216 = vmatprep.subr.mxu0 0.0
        %217 = vmatpush1.msra.mxu0 0.0
        %218 = vmatprep.subr.mxu0 0.0
        %219 = vmatpush1.msra.mxu0 0.0
        %220 = vmatprep.subr.mxu0 0.0
        %221 = vmatpush1.msra.mxu0 0.0
        %222 = vmatprep.subr.mxu0 0.0
        %223 = vmatpush1.msra.mxu0 0.0
        %224 = vmatprep.subr.mxu0 0.0
        %225 = vmatpush1.msra.mxu0 0.0
        %226 = vmatprep.subr.mxu0 0.0
        %227 = vmatpush1.msra.mxu0 0.0
        %228 = vmatprep.subr.mxu0 0.0
        %229 = vmatpush1.msra.mxu0 0.0
        %230 = vmatprep.subr.mxu0 0.0
        %231 = vmatpush1.msra.mxu0 0.0
        %232 = vmatprep.subr.mxu0 0.0
        %233 = vmatpush1.msra.mxu0 0.0
        %234 = vmatprep.subr.mxu0 0.0
        %235 = vmatpush1.msra.mxu0 0.0
        %236 = vmatprep.subr.mxu0 0.0
        %237 = vmatpush1.msra.mxu0 0.0
        %238 = vmatprep.subr.mxu0 %v206
        %239 = vmatpush1.msra.mxu0 %v205
        %240 = vmatprep.subr.mxu0 %v204
        %241 = vmatpush1.msra.mxu0 %v203
        %242 = vmatprep.subr.mxu0 %v202
        %243 = vmatpush1.msra.mxu0 %v201
        %244 = vmatprep.subr.mxu0 %v200
        %245 = vmatpush1.msra.mxu0 %v199
        %246 = vmatprep.subr.mxu0 0.0
        %247 = vmatpush2.msra.mxu0 0.0
        %248 = vmatprep.subr.mxu0 0.0
        %249 = vmatpush2.msra.mxu0 0.0
        %250 = vmatprep.subr.mxu0 0.0
        %251 = vmatpush2.msra.mxu0 0.0
        %252 = vmatprep.subr.mxu0 0.0
        %253 = vmatpush2.msra.mxu0 0.0
        %254 = vmatprep.subr.mxu0 0.0
        %255 = vmatpush2.msra.mxu0 0.0
        %256 = vmatprep.subr.mxu0 0.0
        %257 = vmatpush2.msra.mxu0 0.0
        %258 = vmatprep.subr.mxu0 0.0
        %259 = vmatpush2.msra.mxu0 0.0
        %260 = vmatprep.subr.mxu0 0.0
        %261 = vmatpush2.msra.mxu0 0.0
        %262 = vmatprep.subr.mxu0 0.0
        %263 = vmatpush2.msra.mxu0 0.0
        %264 = vmatprep.subr.mxu0 0.0
        %265 = vmatpush2.msra.mxu0 0.0
        %266 = vmatprep.subr.mxu0 0.0
        %267 = vmatpush2.msra.mxu0 0.0
        %268 = vmatprep.subr.mxu0 0.0
        %269 = vmatpush2.msra.mxu0 0.0
        %270 = vmatprep.subr.mxu0 0.0
        %271 = vmatpush2.msra.mxu0 0.0
        %272 = vmatprep.subr.mxu0 0.0
        %273 = vmatpush2.msra.mxu0 0.0
        %274 = vmatprep.subr.mxu0 0.0
        %275 = vmatpush2.msra.mxu0 0.0
        %276 = vmatprep.subr.mxu0 0.0
        %277 = vmatpush2.msra.mxu0 0.0
        %278 = vmatprep.mubr.f32.mxu0 0.0
        %279 = vmatmul.mubr.f32.gmra.mxu0 %v209
        %v280 = vpop.f32.mrf.mxu0
        %v281 = vadd.f32 0.0, %v280
        %v282 = vpop.f32.mrf.mxu0
        %v283 = vadd.f32 0.0, %v282
        %284 = vmatprep.mubr.f32.mxu0 0.0
        %285 = vmatmul.mubr.f32.gmra.mxu0 %v212
        %v286 = vpop.f32.mrf.mxu0
        %v287 = vadd.f32 0.0, %v286
        %v288 = vpop.f32.mrf.mxu0
        %v289 = vadd.f32 0.0, %v288
        %290 = vdwg.mxu0
        %v291 = vpack.c.bf16 %v287, %v281
        %v292 = vpack.c.bf16 %v289, %v283
        %v295 = vunpack.c.l.b16 %v291
        %v296 = vunpack.c.l.b16 %v292
        %v297 = vunpack.c.h.b16 %v291
        %v298 = vunpack.c.h.b16 %v292
        %v299 = vpack.c.b16 %v296, %v295
        %v300 = vpack.c.b16 %v298, %v297
        %303 = vst [vmem:[%s194] sm:$0xff] %v299
        %304 = vst [vmem:[%s194 + $0x8] sm:$0xff] %v300
        %s305 = sand.u32 %s91, 1
        %s306 = scalar_lea.sflag [#allocation4], %s305
        %s307 = sand.u32 %s91, 1
        %s308 = smul.addr %s307, 16
        %s309 = scalar_lea.vmem [#allocation7], %s308
        // Predicated region
        $region37: #{tpu_custom_call.1} parent=27 // pred_check
          %p310 = pneg %p101
        $region38: #{tpu_custom_call.1} parent=27 // pred_check_branch
          %312 = sbr.rel (%p310) target = $region40
        $region39: #{tpu_custom_call.1} parent=27 // pred_region
          %s313 = smul.u32 2, %s25
          %s315 = ssub.s32 256, 256
          %316 = vsyncadd %s306, %s315
          %s317 = smul.addr %s313, 2
          %s318 = smul.addr %s24, 4
          %s319 = sadd.s32 %s317, %s318
          %s320 = smul.addr %s319, 64
          %s321 = scalar_lea.hbm %s2, %s320
          %s322 = sshll.u32 %s309, 4
          %s323 = int_to_ptr.vmem [resolvable:$true] %s322
          %328 = dma.vmem_to_hbm [thread:$0]  %s323, 256, %s321, %s306, 128, 128, 8
        $region40: #{tpu_custom_call.1} parent=27 // pred_fallthru
          _
      $region28: #{tpu_custom_call.1} parent=5 // pred_fallthru
        _
      %p329 = scmp.le.s32.totalorder 2, %s15
      // Predicated region
      $region41: #{tpu_custom_call.1} parent=5 // pred_check
        %p330 = pneg %p329
      $region42: #{tpu_custom_call.1} parent=5 // pred_check_branch
        %332 = sbr.rel (%p330) target = $region44
      $region43: #{tpu_custom_call.1} parent=5 // pred_region
        %s333 = ssub.s32 %s15, 2
        // Predicated region
        $region45: #{tpu_custom_call.1} parent=43 // pred_check
          %p334 = pneg %p107
        $region46: #{tpu_custom_call.1} parent=43 // pred_check_branch
          %336 = sbr.rel (%p334) target = $region48
        $region47: #{tpu_custom_call.1} parent=43 // pred_region
          %s337 = sand.u32 %s92, 1
          %s338 = scalar_lea.sflag [#allocation4], %s337
          %s339 = sand.u32 %s92, 1
          %s340 = smul.addr %s339, 16
          %s341 = scalar_lea.vmem [#allocation7], %s340
          %342 = dma.done %s338, 256
        $region48: #{tpu_custom_call.1} parent=43 // pred_fallthru
          _
      $region44: #{tpu_custom_call.1} parent=5 // pred_fallthru
        _
    $region6: #{tpu_custom_call.1} parent=1 // loop_footer
      %s19 = sadd.s32 1, %s15
    $region7: #{tpu_custom_call.1} parent=1 // loop_footer_branch
      %14 = sbr.rel target = $region3
    $region8: #{tpu_custom_call.1} parent=1 // loop_exit
      _
    %343 = vsyncpa [#allocation3], 1
    %s344 = scalar_lea.sflag [#allocation3], 1
    %345 = vsyncpa %s344, 1
    %346 = vsyncpa [#allocation6], 1
    %347 = vsyncpa [#allocation4], 1
    %s348 = scalar_lea.sflag [#allocation4], 1
    %349 = vsyncpa %s348, 1

</llo_original>
